<compile_context>
chip_gen: v7x
topology: tpu7x:2x2x1
jax: 0.10.0
libtpu: 0.0.40
codegen_flags: <defaults>
</compile_context>

<pallas_src>
import functools

import jax
import jax.numpy as jnp
from jax.experimental import pallas as pl
from jax.experimental.pallas import tpu as pltpu


def _round_up(x, m):
    return (x + m - 1) // m * m


def _cdiv(a, b):
    return (a + b - 1) // b


# -----------------------------------------------------------------------------
# Kernels
# -----------------------------------------------------------------------------
def _lora_fused_kernel(x_ref, down_ref, up_ref, o_ref):
    """Single K step: o = (x @ down_t) @ up_t  (scale already folded into up_t)."""
    h = jnp.dot(x_ref[...].astype(down_ref.dtype), down_ref[...],
                preferred_element_type=jnp.float32)
    o_ref[...] = jnp.dot(h, up_ref[...].astype(jnp.float32),
                         preferred_element_type=jnp.float32).astype(o_ref.dtype)


def _make_lora_kblocked_kernel(tk, rem):
    """K-blocked kernel; down_t is fully VMEM-resident and sliced in-kernel."""

    def kernel(x_ref, down_ref, up_ref, o_ref, acc_ref):
        k = pl.program_id(1)
        nk = pl.num_programs(1)

        @pl.when(k == 0)
        def _init():
            acc_ref[...] = jnp.zeros_like(acc_ref)

        xt = x_ref[...].astype(down_ref.dtype)
        if rem:
            # Ragged K tail: the last x block is only `rem` columns wide in HBM;
            # zero the stale tail of the VMEM tile so it cannot pollute the sum.
            col = jax.lax.broadcasted_iota(jnp.int32, xt.shape, 1)
            valid = jnp.where(k == nk - 1, rem, tk)
            xt = jnp.where(col < valid, xt, jnp.zeros_like(xt))

        off = pl.multiple_of(k * tk, 128)
        acc_ref[...] += jnp.dot(xt, down_ref[pl.ds(off, tk), :],
                                preferred_element_type=jnp.float32)

        @pl.when(k == nk - 1)
        def _finalize():
            o_ref[...] = jnp.dot(acc_ref[...], up_ref[...].astype(jnp.float32),
                                 preferred_element_type=jnp.float32
                                 ).astype(o_ref.dtype)

    return kernel


# -----------------------------------------------------------------------------
# Wrapper
# -----------------------------------------------------------------------------
@functools.partial(
    jax.jit,
    static_argnames=("tile_m", "tile_k", "compute_dtype", "out_dtype", "block_k"))
def lora_forward(x, down, up, scale=1.0, *,
                 tile_m=512, tile_k=2048,
                 compute_dtype=jnp.bfloat16,
                 out_dtype=None,
                 block_k=None):
    """LoRA forward: y = (x @ down.T) @ up.T * scale.

    x: (..., in_dim); down: (rank, in_dim); up: (out_dim, rank).
    block_k: None = auto (VMEM-budget driven), True/False = force K blocking.
    """
    *lead, in_dim = x.shape
    rank, in_dim_w = down.shape
    out_dim, rank_w = up.shape
    assert in_dim == in_dim_w and rank == rank_w

    if out_dtype is None:
        out_dtype = x.dtype
    out_dtype = jnp.dtype(out_dtype)
    compute_dtype = jnp.dtype(compute_dtype)

    x2d = x.reshape(-1, in_dim)          # metadata-only; no data pass over x
    M = x2d.shape[0]

    xb = x2d.dtype.itemsize
    cb = compute_dtype.itemsize
    ob = out_dtype.itemsize

    in128 = _round_up(in_dim, 128)
    out128 = _round_up(out_dim, 128)
    rank_p = _round_up(rank, 16)         # >= one sublane tile for both f32/bf16

    # ---- VMEM budget derived from the device (headroom for Mosaic internals) ----
    vmem_cap = 64 << 20                  # conservative default (v7x per-core VMEM)
    try:
        vmem_cap = int(getattr(pltpu.get_tpu_info(), "vmem_capacity_bytes",
                               vmem_cap))
    except Exception:
        pass
    budget = min(vmem_cap - (12 << 20), int(vmem_cap * 0.85))

    # Resident weights (fetched once since their index_map is constant, but the
    # pipeline still keeps two buffers).  Sizes include lane/sublane padding.
    down_vmem = 2 * _round_up(in128, 16) * max(rank_p, 128) * cb
    up_vmem = 2 * rank_p * out128 * cb
    fixed = down_vmem + up_vmem
    out_row = 2 * out128 * ob            # double-buffered output tile, per row

    def fit_tile_m(row_bytes):
        tm = M if M <= tile_m else max(8, (tile_m // 8) * 8)
        while tm > 8 and fixed + tm * row_bytes > budget:
            tm = max(8, ((tm // 2) // 8) * 8)
        return tm, fixed + tm * row_bytes <= budget

    fused_row = 2 * in128 * xb + out_row
    tm_fused, fused_fits = fit_tile_m(fused_row)

    if block_k is None:
        use_kblocked = not (fused_fits and tm_fused >= min(M, 256))
    else:
        use_kblocked = bool(block_k)

    # Scale folded into the tiny up projection once, in f32.
    up_scaled = (up.astype(jnp.float32) * jnp.asarray(scale, jnp.float32)).T
    up_t = jnp.zeros((rank_p, out_dim), compute_dtype)
    up_t = up_t.at[:rank, :].set(up_scaled.astype(compute_dtype))

    if not use_kblocked:
        # ------------------- fused single-K-step path ------------------------
        tm = tm_fused
        down_t = jnp.zeros((in_dim, rank_p), compute_dtype)
        down_t = down_t.at[:, :rank].set(down.T.astype(compute_dtype))

        grid = (_cdiv(M, tm),)
        in_specs = [
            pl.BlockSpec((tm, in_dim), lambda i: (i, 0)),
            pl.BlockSpec((in_dim, rank_p), lambda i: (0, 0)),
            pl.BlockSpec((rank_p, out_dim), lambda i: (0, 0)),
        ]
        out_specs = pl.BlockSpec((tm, out_dim), lambda i: (i, 0))
        scratch_shapes = ()
        dim_sem = ("parallel",)
        kernel = _lora_fused_kernel
        need = fixed + tm * fused_row
    else:
        # ------------------- K-blocked accumulator path ----------------------
        tk_req = max(128, min(_round_up(tile_k, 128), in128))
        n_k = _cdiv(in128, tk_req)
        tk = _round_up(_cdiv(in128, n_k), 128)      # balanced 128-aligned chunks
        grid_k = _cdiv(in_dim, tk)
        rem = in_dim - (grid_k - 1) * tk            # valid cols in last K block
        rem = 0 if rem == tk else rem
        k_pad = grid_k * tk

        kblk_row = 2 * tk * xb + out_row + max(rank_p, 128) * 4   # + f32 acc
        tm, _ = fit_tile_m(kblk_row)

        # Zero-pad down.T rows to k_pad so the in-kernel pl.ds slice is always
        # in-bounds (tiny: rank_p columns).
        down_t = jnp.zeros((k_pad, rank_p), compute_dtype)
        down_t = down_t.at[:in_dim, :rank].set(down.T.astype(compute_dtype))

        grid = (_cdiv(M, tm), grid_k)
        in_specs = [
            pl.BlockSpec((tm, tk), lambda i, k: (i, k)),
            pl.BlockSpec((k_pad, rank_p), lambda i, k: (0, 0)),
            pl.BlockSpec((rank_p, out_dim), lambda i, k: (0, 0)),
        ]
        out_specs = pl.BlockSpec((tm, out_dim), lambda i, k: (i, 0))
        scratch_shapes = (pltpu.VMEM((tm, rank_p), jnp.float32),)
        dim_sem = ("parallel", "arbitrary")
        kernel = _make_lora_kblocked_kernel(tk, rem)
        need = fixed + tm * kblk_row

    vmem_limit = int(min(vmem_cap, max(need + (16 << 20), 32 << 20)))

    out2d = pl.pallas_call(
        kernel,
        out_shape=jax.ShapeDtypeStruct((M, out_dim), out_dtype),
        grid_spec=pltpu.PrefetchScalarGridSpec(
            num_scalar_prefetch=0,
            grid=grid,
            in_specs=in_specs,
            out_specs=out_specs,
            scratch_shapes=scratch_shapes,
        ),
        compiler_params=pltpu.CompilerParams(
            dimension_semantics=dim_sem,
            vmem_limit_bytes=vmem_limit),
    )(x2d, down_t, up_t)

    return out2d.reshape(*lead, out_dim)


if __name__ == "__main__":
    key = jax.random.PRNGKey(0)

    def ref_lora(x, down, up, scale):
        return jnp.matmul(
            jnp.matmul(x, down.T, precision=jax.lax.Precision.HIGHEST),
            up.T, precision=jax.lax.Precision.HIGHEST) * scale

    # --- Test 1: module-default small shapes (fused single-K-step path) -----
    B, S, in_dim, out_dim, rank = 2, 8, 128, 128, 4
    k1, k2, k3, key = jax.random.split(key, 4)
    x = jax.random.normal(k1, (B, S, in_dim), dtype=jnp.float32)
    down = jax.random.normal(k2, (rank, in_dim), dtype=jnp.float32) * 0.02
    up = jax.random.normal(k3, (out_dim, rank), dtype=jnp.float32) * 0.02
    scale = 1.0
    y_ref = ref_lora(x, down, up, scale)

    # f32 compute path: tight check.
    y_f32 = jax.block_until_ready(
        lora_forward(x, down, up, scale, compute_dtype=jnp.float32))
    assert y_f32.shape == (B, S, out_dim)
    assert y_f32.dtype == x.dtype
    assert jnp.allclose(y_f32, y_ref, atol=5e-4, rtol=1e-3), "f32 path mismatch"

    # Default bf16 fast path (f32 MXU accumulation): loose check vs f32 ref.
    y_bf16 = jax.block_until_ready(lora_forward(x, down, up, scale))
    assert y_bf16.shape == (B, S, out_dim)
    assert jnp.allclose(y_bf16, y_ref, atol=5e-3, rtol=5e-2), "bf16 path mismatch"

    # --- Test 2: ragged M and ragged K, forced K-blocked accumulator path ---
    B2, S2, in2, out2, rank2 = 1, 40, 320, 96, 4
    k4, k5, k6, key = jax.random.split(key, 4)
    x2 = jax.random.normal(k4, (B2, S2, in2), dtype=jnp.float32)
    down2 = jax.random.normal(k5, (rank2, in2), dtype=jnp.float32) * 0.02
    up2 = jax.random.normal(k6, (out2, rank2), dtype=jnp.float32) * 0.02
    y2_ref = ref_lora(x2, down2, up2, 0.5)

    y2 = jax.block_until_ready(
        lora_forward(x2, down2, up2, 0.5, compute_dtype=jnp.float32,
                     tile_m=16, tile_k=128, block_k=True))
    assert y2.shape == (B2, S2, out2)
    assert jnp.allclose(y2, y2_ref, atol=5e-4, rtol=1e-3), "K-blocked path mismatch"

    print("KERNEL_OK")
</pallas_src>

<mosaic_0001>
module attributes {stable_mosaic.version = 11 : i64} {
  func.func @_lora_fused_kernel(%arg0: i32, %arg1: memref<16x128xf32, #tpu.memory_space<vmem>>, %arg2: memref<128x16xf32, #tpu.memory_space<vmem>>, %arg3: memref<16x128xf32, #tpu.memory_space<vmem>>, %arg4: memref<16x128xf32, #tpu.memory_space<vmem>>) attributes {dimension_semantics = [#tpu.dimension_semantics<parallel>], iteration_bounds = array<i64: 1>, scalar_prefetch = 0 : i64, scratch_operands = 0 : i64, tpu.core_type = #tpu.core_type<tc>, window_params = [{transform_indices = @transform_0, window_bounds = array<i64: 16, 128>}, {pipeline_mode = #tpu.pipeline_mode<synchronous>, transform_indices = @transform_1, window_bounds = array<i64: 128, 16>}, {pipeline_mode = #tpu.pipeline_mode<synchronous>, transform_indices = @transform_2, window_bounds = array<i64: 16, 128>}, {transform_indices = @transform_3, window_bounds = array<i64: 16, 128>}]} {
    %c0 = arith.constant 0 : index
    %c0_0 = arith.constant 0 : index
    %0 = vector.load %arg1[%c0, %c0_0] : memref<16x128xf32, #tpu.memory_space<vmem>>, vector<16x128xf32>
    %c0_1 = arith.constant 0 : index
    %c0_2 = arith.constant 0 : index
    %1 = vector.load %arg2[%c0_1, %c0_2] : memref<128x16xf32, #tpu.memory_space<vmem>>, vector<128x16xf32>
    %cst = arith.constant dense<0.000000e+00> : vector<16x16xf32>
    %2 = tpu.matmul %0, %1, %cst {dimension_numbers = #tpu.dot_dimension_numbers<[1], [0], [0], [1], [0, 0, 1, 1], [], []>} : vector<16x128xf32>, vector<128x16xf32>, vector<16x16xf32> -> vector<16x16xf32>
    %c0_3 = arith.constant 0 : index
    %c0_4 = arith.constant 0 : index
    %3 = vector.load %arg3[%c0_3, %c0_4] : memref<16x128xf32, #tpu.memory_space<vmem>>, vector<16x128xf32>
    %cst_5 = arith.constant dense<0.000000e+00> : vector<16x128xf32>
    %4 = tpu.matmul %2, %3, %cst_5 {dimension_numbers = #tpu.dot_dimension_numbers<[1], [0], [0], [1], [0, 0, 1, 1], [], []>} : vector<16x16xf32>, vector<16x128xf32>, vector<16x128xf32> -> vector<16x128xf32>
    %c0_6 = arith.constant 0 : index
    %c0_7 = arith.constant 0 : index
    %5 = vector.load %arg4[%c0_6, %c0_7] : memref<16x128xf32, #tpu.memory_space<vmem>>, vector<16x128xf32>
    tpu.vector_store %arg4[%c0_6, %c0_7], %4 {strides = array<i32>} : memref<16x128xf32, #tpu.memory_space<vmem>>, vector<16x128xf32>,
    return
  }
  func.func @transform_0(%arg0: i32) -> (i32, i32) {
    %c0_i32 = arith.constant 0 : i32
    %c0_i32_0 = arith.constant 0 : i32
    return %arg0, %c0_i32 : i32, i32
  }
  func.func @transform_1(%arg0: i32) -> (i32, i32) {
    %c0_i32 = arith.constant 0 : i32
    %c0_i32_0 = arith.constant 0 : i32
    %c0_i32_1 = arith.constant 0 : i32
    return %c0_i32, %c0_i32_0 : i32, i32
  }
  func.func @transform_2(%arg0: i32) -> (i32, i32) {
    %c0_i32 = arith.constant 0 : i32
    %c0_i32_0 = arith.constant 0 : i32
    %c0_i32_1 = arith.constant 0 : i32
    return %c0_i32, %c0_i32_0 : i32, i32
  }
  func.func @transform_3(%arg0: i32) -> (i32, i32) {
    %c0_i32 = arith.constant 0 : i32
    %c0_i32_0 = arith.constant 0 : i32
    return %arg0, %c0_i32 : i32, i32
  }
}

</mosaic_0001>

<llo_original>
// kernel: lora_forward.1
$region0: #{lora_forward.1}
  #allocation0 [shape = 'u32[]', space=smem, size = 0x4, offset = 0x4, fixed_abs, tag = 'smem constant byte address 0x4 - core index']
  #allocation1 [shape = 'u32[144,128]{1,0:T(1,128)}', space=vmem, size = 0x12000, scoped, tag = 'internal scratch']
  %s0 = inlined_call_operand.vmem [shape: f32[16,128], index: 0, kind: input, shape index: {}]
  %s1 = inlined_call_operand.vmem [shape: f32[128,16], index: 1, kind: input, shape index: {}]
  %s2 = inlined_call_operand.vmem [shape: f32[16,128], index: 2, kind: input, shape index: {}]
  %s3 = inlined_call_operand.hbm [shape: f32[16,128], index: 3, kind: output, shape index: {}]
  %s4 = sld [smem:[#allocation0]]
  $region22: #{lora_forward.1} parent=0
    _
  %s6 = ssub.s32 1, %s4
  %s7 = scalar_select 0, %s6, %s4
  $region1: #{lora_forward.1} parent=0
    #allocation2 [shape = 'u8[8192]{0}', space=vmem, size = 0x2000, scoped, tag = 'output window, operand 0, single buffered']
    #allocation3 [shape = 's32[1]{0}', space=sflag, size = 0x4, scoped, tag = 'scoped memory for lora_forward.1']
    %8 = vsyncpa [#allocation3], 0
    // Predicated region
    $region2: #{lora_forward.1} parent=1 // pred_check
      _
    $region3: #{lora_forward.1} parent=1 // pred_check_branch
      %10 = sbr.rel (0) target = $region5
    $region4: #{lora_forward.1} parent=1 // pred_region
      _
    $region5: #{lora_forward.1} parent=1 // pred_fallthru
      _
    // Predicated region
    $region6: #{lora_forward.1} parent=1 // pred_check
      _
    $region7: #{lora_forward.1} parent=1 // pred_check_branch
      %12 = sbr.rel (0) target = $region9
    $region8: #{lora_forward.1} parent=1 // pred_region
      _
    $region9: #{lora_forward.1} parent=1 // pred_fallthru
      _
    // Predicated region
    $region10: #{lora_forward.1} parent=1 // pred_check
      _
    $region11: #{lora_forward.1} parent=1 // pred_check_branch
      %14 = sbr.rel (0) target = $region13
    $region12: #{lora_forward.1} parent=1 // pred_region
      _
    $region13: #{lora_forward.1} parent=1 // pred_fallthru
      _
    %v15 = vld [vmem:[%s0] sm:$0xff]
    %v16 = vld [vmem:[%s0 + $0x8] sm:$0xff]
    %v17 = vld [vmem:[%s1] sm:$0xff]
    %v18 = vld [vmem:[%s1 + $0x8] sm:$0xff]
    %v19 = vld [vmem:[%s1 + $0x10] sm:$0xff]
    %v20 = vld [vmem:[%s1 + $0x18] sm:$0xff]
    %v21 = vld [vmem:[%s1 + $0x20] sm:$0xff]
    %v22 = vld [vmem:[%s1 + $0x28] sm:$0xff]
    %v23 = vld [vmem:[%s1 + $0x30] sm:$0xff]
    %v24 = vld [vmem:[%s1 + $0x38] sm:$0xff]
    %v25 = vld [vmem:[%s1 + $0x40] sm:$0xff]
    %v26 = vld [vmem:[%s1 + $0x48] sm:$0xff]
    %v27 = vld [vmem:[%s1 + $0x50] sm:$0xff]
    %v28 = vld [vmem:[%s1 + $0x58] sm:$0xff]
    %v29 = vld [vmem:[%s1 + $0x60] sm:$0xff]
    %v30 = vld [vmem:[%s1 + $0x68] sm:$0xff]
    %v31 = vld [vmem:[%s1 + $0x70] sm:$0xff]
    %v32 = vld [vmem:[%s1 + $0x78] sm:$0xff]
    %33 = vmatprep.subr.mxu0 0.0
    %34 = vmatpush1.msra.mxu0 %v17
    %35 = vmatprep.subr.mxu0 0.0
    %36 = vmatpush1.msra.mxu0 %v18
    %37 = vmatprep.subr.mxu0 0.0
    %38 = vmatpush1.msra.mxu0 %v19
    %39 = vmatprep.subr.mxu0 0.0
    %40 = vmatpush1.msra.mxu0 %v20
    %41 = vmatprep.subr.mxu0 0.0
    %42 = vmatpush1.msra.mxu0 %v21
    %43 = vmatprep.subr.mxu0 0.0
    %44 = vmatpush1.msra.mxu0 %v22
    %45 = vmatprep.subr.mxu0 0.0
    %46 = vmatpush1.msra.mxu0 %v23
    %47 = vmatprep.subr.mxu0 0.0
    %48 = vmatpush1.msra.mxu0 %v24
    %49 = vmatprep.subr.mxu0 0.0
    %50 = vmatpush1.msra.mxu0 %v25
    %51 = vmatprep.subr.mxu0 0.0
    %52 = vmatpush1.msra.mxu0 %v26
    %53 = vmatprep.subr.mxu0 0.0
    %54 = vmatpush1.msra.mxu0 %v27
    %55 = vmatprep.subr.mxu0 0.0
    %56 = vmatpush1.msra.mxu0 %v28
    %57 = vmatprep.subr.mxu0 0.0
    %58 = vmatpush1.msra.mxu0 %v29
    %59 = vmatprep.subr.mxu0 0.0
    %60 = vmatpush1.msra.mxu0 %v30
    %61 = vmatprep.subr.mxu0 0.0
    %62 = vmatpush1.msra.mxu0 %v31
    %63 = vmatprep.subr.mxu0 0.0
    %64 = vmatpush1.msra.mxu0 %v32
    %65 = vmatprep.subr.mxu0 0.0
    %66 = vmatpush1.msra.mxu0 0.0
    %67 = vmatprep.subr.mxu0 0.0
    %68 = vmatpush1.msra.mxu0 0.0
    %69 = vmatprep.subr.mxu0 0.0
    %70 = vmatpush1.msra.mxu0 0.0
    %71 = vmatprep.subr.mxu0 0.0
    %72 = vmatpush1.msra.mxu0 0.0
    %73 = vmatprep.subr.mxu0 0.0
    %74 = vmatpush1.msra.mxu0 0.0
    %75 = vmatprep.subr.mxu0 0.0
    %76 = vmatpush1.msra.mxu0 0.0
    %77 = vmatprep.subr.mxu0 0.0
    %78 = vmatpush1.msra.mxu0 0.0
    %79 = vmatprep.subr.mxu0 0.0
    %80 = vmatpush1.msra.mxu0 0.0
    %81 = vmatprep.subr.mxu0 0.0
    %82 = vmatpush1.msra.mxu0 0.0
    %83 = vmatprep.subr.mxu0 0.0
    %84 = vmatpush1.msra.mxu0 0.0
    %85 = vmatprep.subr.mxu0 0.0
    %86 = vmatpush1.msra.mxu0 0.0
    %87 = vmatprep.subr.mxu0 0.0
    %88 = vmatpush1.msra.mxu0 0.0
    %89 = vmatprep.subr.mxu0 0.0
    %90 = vmatpush1.msra.mxu0 0.0
    %91 = vmatprep.subr.mxu0 0.0
    %92 = vmatpush1.msra.mxu0 0.0
    %93 = vmatprep.subr.mxu0 0.0
    %94 = vmatpush1.msra.mxu0 0.0
    %95 = vmatprep.subr.mxu0 0.0
    %96 = vmatpush1.msra.mxu0 0.0
    %97 = vmatprep.mubr.f32.mxu0 0.0
    %98 = vmatmul.mubr.f32.gmra.mrb[0].mxu0 %v15
    %v99 = vpop.f32.mrb[0].mxu0
    %v100 = vadd.f32 0.0, %v99
    %v101 = vpop.f32.mrb[0].mxu0
    %102 = vmatprep.mubr.f32.mxu0 0.0
    %103 = vmatmul.mubr.f32.gmra.mrb[0].mxu0 %v16
    %v104 = vpop.f32.mrb[0].mxu0
    %v105 = vadd.f32 0.0, %v104
    %v106 = vpop.f32.mrb[0].mxu0
    %107 = vdwg.mxu0
    %v108 = vld [vmem:[%s2] sm:$0xff]
    %v109 = vld [vmem:[%s2 + $0x8] sm:$0xff]
    %vm110 = vcmask 130048
    %v112 = vsel %vm110, %v100, 0
    %v115 = vsel %vm110, %v105, 0
    %117 = vmatprep.subr.mxu0 0.0
    %118 = vmatpush1.msra.mxu0 %v108
    %119 = vmatprep.subr.mxu0 0.0
    %120 = vmatpush1.msra.mxu0 %v109
    %121 = vmatprep.subr.mxu0 0.0
    %122 = vmatpush1.msra.mxu0 0.0
    %123 = vmatprep.subr.mxu0 0.0
    %124 = vmatpush1.msra.mxu0 0.0
    %125 = vmatprep.subr.mxu0 0.0
    %126 = vmatpush1.msra.mxu0 0.0
    %127 = vmatprep.subr.mxu0 0.0
    %128 = vmatpush1.msra.mxu0 0.0
    %129 = vmatprep.subr.mxu0 0.0
    %130 = vmatpush1.msra.mxu0 0.0
    %131 = vmatprep.subr.mxu0 0.0
    %132 = vmatpush1.msra.mxu0 0.0
    %133 = vmatprep.subr.mxu0 0.0
    %134 = vmatpush1.msra.mxu0 0.0
    %135 = vmatprep.subr.mxu0 0.0
    %136 = vmatpush1.msra.mxu0 0.0
    %137 = vmatprep.subr.mxu0 0.0
    %138 = vmatpush1.msra.mxu0 0.0
    %139 = vmatprep.subr.mxu0 0.0
    %140 = vmatpush1.msra.mxu0 0.0
    %141 = vmatprep.subr.mxu0 0.0
    %142 = vmatpush1.msra.mxu0 0.0
    %143 = vmatprep.subr.mxu0 0.0
    %144 = vmatpush1.msra.mxu0 0.0
    %145 = vmatprep.subr.mxu0 0.0
    %146 = vmatpush1.msra.mxu0 0.0
    %147 = vmatprep.subr.mxu0 0.0
    %148 = vmatpush1.msra.mxu0 0.0
    %149 = vmatprep.subr.mxu0 0.0
    %150 = vmatpush1.msra.mxu0 0.0
    %151 = vmatprep.subr.mxu0 0.0
    %152 = vmatpush1.msra.mxu0 0.0
    %153 = vmatprep.subr.mxu0 0.0
    %154 = vmatpush1.msra.mxu0 0.0
    %155 = vmatprep.subr.mxu0 0.0
    %156 = vmatpush1.msra.mxu0 0.0
    %157 = vmatprep.subr.mxu0 0.0
    %158 = vmatpush1.msra.mxu0 0.0
    %159 = vmatprep.subr.mxu0 0.0
    %160 = vmatpush1.msra.mxu0 0.0
    %161 = vmatprep.subr.mxu0 0.0
    %162 = vmatpush1.msra.mxu0 0.0
    %163 = vmatprep.subr.mxu0 0.0
    %164 = vmatpush1.msra.mxu0 0.0
    %165 = vmatprep.subr.mxu0 0.0
    %166 = vmatpush1.msra.mxu0 0.0
    %167 = vmatprep.subr.mxu0 0.0
    %168 = vmatpush1.msra.mxu0 0.0
    %169 = vmatprep.subr.mxu0 0.0
    %170 = vmatpush1.msra.mxu0 0.0
    %171 = vmatprep.subr.mxu0 0.0
    %172 = vmatpush1.msra.mxu0 0.0
    %173 = vmatprep.subr.mxu0 0.0
    %174 = vmatpush1.msra.mxu0 0.0
    %175 = vmatprep.subr.mxu0 0.0
    %176 = vmatpush1.msra.mxu0 0.0
    %177 = vmatprep.subr.mxu0 0.0
    %178 = vmatpush1.msra.mxu0 0.0
    %179 = vmatprep.subr.mxu0 0.0
    %180 = vmatpush1.msra.mxu0 0.0
    %181 = vmatprep.mubr.f32.mxu0 0.0
    %182 = vmatmul.mubr.f32.gmra.mrb[0].mxu0 %v112
    %v183 = vpop.f32.mrb[0].mxu0
    %v184 = vadd.f32 0.0, %v183
    %v185 = vpop.f32.mrb[0].mxu0
    %186 = vmatprep.mubr.f32.mxu0 0.0
    %187 = vmatmul.mubr.f32.gmra.mrb[0].mxu0 %v115
    %v188 = vpop.f32.mrb[0].mxu0
    %v189 = vadd.f32 0.0, %v188
    %v190 = vpop.f32.mrb[0].mxu0
    %191 = vdwg.mxu0
    %192 = vst [vmem:[#allocation2] sm:$0xff] %v184
    %193 = vst [vmem:[#allocation2 + $0x8] sm:$0xff] %v189
    // Predicated region
    $region14: #{lora_forward.1} parent=1 // pred_check
      _
    $region15: #{lora_forward.1} parent=1 // pred_check_branch
      %195 = sbr.rel (0) target = $region17
    $region16: #{lora_forward.1} parent=1 // pred_region
      %s197 = ssub.s32 256, 256
      %198 = vsyncadd [#allocation3], %s197
      %s199 = sshll.u32 [#allocation2], 4
      %s200 = int_to_ptr.vmem [resolvable:$true] %s199
      %205 = dma.vmem_to_hbm [thread:$0]  %s200, 256, %s3, [#allocation3], 128, 128, 8
    $region17: #{lora_forward.1} parent=1 // pred_fallthru
      _
    // Predicated region
    $region18: #{lora_forward.1} parent=1 // pred_check
      _
    $region19: #{lora_forward.1} parent=1 // pred_check_branch
      %207 = sbr.rel (0) target = $region21
    $region20: #{lora_forward.1} parent=1 // pred_region
      %208 = dma.done [#allocation3], 256
    $region21: #{lora_forward.1} parent=1 // pred_fallthru
      _
    %209 = vsyncpa [#allocation3], 1

</llo_original>
